<compile_context>
chip_gen: v7x
topology: tpu7x:2x2x1
jax: 0.10.0
libtpu: 0.0.40
codegen_flags: <defaults>
</compile_context>

<pallas_src>
import functools
import math

import jax
import jax.numpy as jnp
from jax.experimental import pallas as pl
from jax.experimental.pallas import tpu as pltpu


def _round_up(value, multiple):
    return ((value + multiple - 1) // multiple) * multiple


@functools.lru_cache(maxsize=1)
def _physical_vmem_bytes():
    try:
        return int(pltpu.get_tpu_info().vmem_capacity_bytes)
    except Exception:
        return 64 * 1024 * 1024  # conservative (v7x-sized) fallback


def _choose_block_rows(batch):
    """Row-tile heuristic.

    Small batches get a single tile (a split buys nothing on single-TC v5e/v6e
    and only adds ~0.35us/step grid overhead).  Larger batches split into tiles
    of >=128 rows (keeps the MXU fed and gives v7x's two TensorCores balanced
    work via the "parallel" row axis); very large batches use 256-row tiles.
    """
    if batch <= 256:
        return _round_up(batch, 16)
    if batch <= 1024:
        n_tiles = -(-batch // 256)
        return _round_up(-(-batch // n_tiles), 16)
    return 256


def _g_linear_kernel(x_ref, w_ref, b_ref, o_ref, *scratch, in_features,
                     out_features, eps, negative_slope, normalize_input, n_k):
    # x_ref: (bm, bk) native dtype      w_ref: (bk, OUT_pad) bf16  (= W^T * he)
    # b_ref: (1, OUT_pad) f32 (= b*he)  o_ref: (bm, OUT_pad) x.dtype
    x = x_ref[...]
    # MXU: bf16 operands (He constant already folded into the weight), f32 acc.
    part = jnp.dot(x.astype(jnp.bfloat16), w_ref[...],
                   preferred_element_type=jnp.float32)
    if normalize_input:
        xf = x.astype(jnp.float32)
        ssq_part = jnp.sum(xf * xf, axis=1, keepdims=True)

    def _epilogue(acc, ssq_in):
        y = acc
        if normalize_input:
            # Pixel_Norm(x) is a per-row scalar, so it commutes with the matmul:
            #   (x * inv_norm) @ (he*W)^T == (x @ (he*W)^T) * inv_norm
            # Padded input columns are zero; divide by the true feature count.
            y = y * jax.lax.rsqrt(ssq_in * (1.0 / in_features) + eps)
        y = y + b_ref[...]                        # bias pre-scaled by he
        y = jnp.maximum(y, negative_slope * y)    # LeakyReLU(0.2): mul + max
        # Pixel_Norm over the feature axis. Padded output columns are exactly
        # zero (zero weight cols + zero bias), so use the true out_features.
        ssq = jnp.sum(y * y, axis=1, keepdims=True) * (1.0 / out_features)
        o_ref[...] = (y * jax.lax.rsqrt(ssq + eps)).astype(o_ref.dtype)

    if n_k == 1:
        _epilogue(part, ssq_part if normalize_input else None)
    else:
        acc_ref = scratch[0]
        ssq_ref = scratch[1] if normalize_input else None
        k = pl.program_id(1)

        @pl.when(k == 0)
        def _():
            acc_ref[...] = part
            if normalize_input:
                ssq_ref[...] = ssq_part

        @pl.when(k > 0)
        def _():
            acc_ref[...] += part
            if normalize_input:
                ssq_ref[...] += ssq_part

        @pl.when(k == n_k - 1)
        def _():
            _epilogue(acc_ref[...], ssq_ref[...] if normalize_input else None)


def prepare_g_linear_params(weight, bias, *, block_k=None):
    """One-time weight/bias prep (transpose, pad, fold He constant, bf16 cast).

    Call once and reuse the returned dict across forwards so the full-weight
    reshuffle is not re-done (and re-read from HBM) on every call.
    weight: (out_features, in_features) PyTorch nn.Linear layout.
    """
    out_features, in_features = weight.shape
    he = math.sqrt(2.0 / in_features)           # fan_in = prod(weight.shape[1:])

    out_pad = _round_up(out_features, 128)
    in_pad0 = _round_up(in_features, 128)
    if block_k is None:
        # Keep each (block_k, OUT_pad) bf16 weight slab <= ~8 MiB so a
        # double-buffered K pipeline stays well inside v7x's 64 MiB VMEM.
        budget = 8 * 1024 * 1024
        block_k = max(128, (budget // max(out_pad * 2, 1)) // 128 * 128)
    block_k = max(128, min(_round_up(int(block_k), 128), in_pad0))
    n_k = -(-in_pad0 // block_k)
    in_pad = n_k * block_k

    w_t = jnp.asarray(weight, jnp.float32).T * he          # fold He once (f32)
    w_t = jnp.pad(w_t, ((0, in_pad - in_features), (0, out_pad - out_features)))
    w_t = w_t.astype(jnp.bfloat16)                         # MXU operand

    b = jnp.reshape(jnp.asarray(bias, jnp.float32), (1, out_features)) * he
    b = jnp.pad(b, ((0, 0), (0, out_pad - out_features)))

    return dict(w=w_t, b=b, in_features=in_features, out_features=out_features,
                in_pad=in_pad, out_pad=out_pad, block_k=block_k, n_k=n_k)


def g_linear_apply(params, x, *, normalize_input=False, block_rows=None,
                   negative_slope=0.2, eps=1e-8):
    """Fused Equalized Linear -> LeakyReLU(0.2) -> PixelNorm (G_Linear.forward).

    normalize_input=True also fuses the Generator's leading Pixel_Norm on x.
    Matches PyTorch semantics: y = (x @ W^T + b) * sqrt(2/in_features).
    """
    batch, in_features = x.shape
    assert in_features == params["in_features"], "x / weight feature mismatch"
    in_pad, out_pad = params["in_pad"], params["out_pad"]
    block_k, n_k = params["block_k"], params["n_k"]
    out_features = params["out_features"]
    out_dtype = x.dtype
    x_itemsize = jnp.dtype(x.dtype).itemsize
    out_itemsize = jnp.dtype(out_dtype).itemsize

    if block_rows is None:
        block_rows = _choose_block_rows(batch)
    block_rows = _round_up(max(int(block_rows), 1), 16)   # bf16/f32 sublane safe
    batch_pad = _round_up(batch, block_rows)
    grid = (batch_pad // block_rows, n_k)

    x_p = x
    if (batch_pad, in_pad) != (batch, in_features):
        x_p = jnp.pad(x_p, ((0, batch_pad - batch), (0, in_pad - in_features)))

    # VMEM budget, capped to the physical VMEM (v7x: 64 MiB) minus headroom.
    # TODO(synk): add an N (out-feature) grid axis for very wide outputs
    # (>~8k cols); the Generator's ch_Latent=512 never needs it.
    w_bufs = 2 if n_k > 1 else 1
    vmem_bytes = (2 * block_rows * block_k * x_itemsize        # x tiles (dbl buf)
                  + (w_bufs + 1) * block_k * out_pad * 2       # bf16 weight slabs
                  + 2 * out_pad * 4                            # bias
                  + 2 * block_rows * out_pad * out_itemsize    # output tiles
                  + (block_rows * (out_pad + 128) * 4 if n_k > 1 else 0)  # scratch
                  + 4 * block_rows * out_pad * 4)              # temporaries headroom
    vmem_cap = max(_physical_vmem_bytes() - 8 * 1024 * 1024, 16 * 1024 * 1024)
    vmem_limit = int(min(max(vmem_bytes, 32 * 1024 * 1024), vmem_cap))

    cost = pl.CostEstimate(
        flops=int(2 * batch_pad * in_pad * out_pad),
        transcendentals=int(batch_pad * (2 if normalize_input else 1)),
        bytes_accessed=int(batch_pad * in_pad * x_itemsize
                           + params["w"].size * 2 + params["b"].size * 4
                           + batch_pad * out_pad * out_itemsize),
    )

    kernel = functools.partial(
        _g_linear_kernel,
        in_features=in_features, out_features=out_features, eps=eps,
        negative_slope=negative_slope, normalize_input=normalize_input, n_k=n_k)

    scratch_shapes = []
    if n_k > 1:
        scratch_shapes.append(pltpu.VMEM((block_rows, out_pad), jnp.float32))
        if normalize_input:
            scratch_shapes.append(pltpu.VMEM((block_rows, 1), jnp.float32))

    def _build(single_buffer_consts):
        const_kw = ({"pipeline_mode": pl.Buffered(1)}
                    if single_buffer_consts else {})
        w_kw = const_kw if n_k == 1 else {}   # weight index varies over k if n_k>1
        return pl.pallas_call(
            kernel,
            out_shape=jax.ShapeDtypeStruct((batch_pad, out_pad), out_dtype),
            grid=grid,
            in_specs=[
                pl.BlockSpec((block_rows, block_k), lambda i, k: (i, k)),
                pl.BlockSpec((block_k, out_pad), lambda i, k: (k, 0), **w_kw),
                pl.BlockSpec((1, out_pad), lambda i, k: (0, 0), **const_kw),
            ],
            out_specs=pl.BlockSpec((block_rows, out_pad), lambda i, k: (i, 0)),
            scratch_shapes=scratch_shapes,
            compiler_params=pltpu.CompilerParams(
                dimension_semantics=("parallel", "arbitrary"),
                vmem_limit_bytes=vmem_limit),
            cost_estimate=cost,
        )

    try:
        # Constant-index weight/bias blocks never re-DMA; single-buffer them to
        # halve their VMEM footprint (matters for big weights on v7x's 64 MiB).
        out = _build(True)(x_p, params["w"], params["b"])
    except Exception:
        # pipeline_mode / Buffered(1) unsupported on this jax: default buffering.
        out = _build(False)(x_p, params["w"], params["b"])

    if (batch_pad, out_pad) != (batch, out_features):
        out = out[:batch, :out_features]
    return out


def g_linear_forward(x, weight, bias, **kwargs):
    """Convenience wrapper (prepares the weight every call).  Prefer
    prepare_g_linear_params() + g_linear_apply() so the prep is cached."""
    block_k = kwargs.pop("block_k", None)
    params = prepare_g_linear_params(weight, bias, block_k=block_k)
    return g_linear_apply(params, x, **kwargs)


def _reference(x, weight, bias, *, normalize_input=False, negative_slope=0.2,
               eps=1e-8):
    """Pure-JAX f32 reference with the PyTorch module's exact semantics:
    Equalized_layer scales (x @ W^T + b) by he = sqrt(2 / fan_in)."""
    x = x.astype(jnp.float32)
    if normalize_input:
        x = x / jnp.sqrt(jnp.mean(x * x, axis=1, keepdims=True) + eps)
    he = math.sqrt(2.0 / x.shape[1])
    y = (x @ weight.astype(jnp.float32).T + bias.reshape(1, -1)) * he
    y = jnp.where(y >= 0.0, y, negative_slope * y)
    return y / jnp.sqrt(jnp.mean(y * y, axis=1, keepdims=True) + eps)


if __name__ == "__main__":
    key = jax.random.PRNGKey(0)

    # Case 1: plain G_Linear (Generator.main_layers[0]-style), params cached once.
    B, IN, OUT = 16, 256, 256
    k1, k2, key = jax.random.split(key, 3)
    x = jax.random.normal(k1, (B, IN), dtype=jnp.float32)
    W = jax.random.normal(k2, (OUT, IN), dtype=jnp.float32)   # equalized init N(0,1)
    b = jnp.zeros((OUT,), dtype=jnp.float32)                  # equalized init: bias=0

    params = prepare_g_linear_params(W, b)                    # cached weight prep
    out = g_linear_apply(params, x)
    jax.block_until_ready(out)
    ref = _reference(x, W, b)
    assert out.shape == (B, OUT) and out.dtype == x.dtype
    assert bool(jnp.allclose(out, ref, atol=3e-2, rtol=3e-2)), "case 1 mismatch"

    # Case 2: ragged non-128 shapes with the Generator's leading Pixel_Norm fused.
    B2, IN2, OUT2 = 12, 96, 192
    k3, k4, key = jax.random.split(key, 3)
    x2 = jax.random.normal(k3, (B2, IN2), dtype=jnp.float32)
    W2 = jax.random.normal(k4, (OUT2, IN2), dtype=jnp.float32)
    b2 = jnp.zeros((OUT2,), dtype=jnp.float32)

    out2 = g_linear_forward(x2, W2, b2, normalize_input=True)
    jax.block_until_ready(out2)
    ref2 = _reference(x2, W2, b2, normalize_input=True)
    assert out2.shape == (B2, OUT2)
    assert bool(jnp.allclose(out2, ref2, atol=3e-2, rtol=3e-2)), "case 2 mismatch"

    # Case 3: force the K-reduction path (block_k=128 -> n_k=3), multiple row
    # tiles, nonzero bias, and the fused input Pixel_Norm (both accumulators).
    B3, IN3, OUT3 = 40, 384, 256
    k5, k6, k7 = jax.random.split(key, 3)
    x3 = jax.random.normal(k5, (B3, IN3), dtype=jnp.float32)
    W3 = jax.random.normal(k6, (OUT3, IN3), dtype=jnp.float32)
    b3 = 0.5 * jax.random.normal(k7, (OUT3,), dtype=jnp.float32)

    params3 = prepare_g_linear_params(W3, b3, block_k=128)
    out3 = g_linear_apply(params3, x3, normalize_input=True, block_rows=16)
    jax.block_until_ready(out3)
    ref3 = _reference(x3, W3, b3, normalize_input=True)
    assert out3.shape == (B3, OUT3)
    assert bool(jnp.allclose(out3, ref3, atol=3e-2, rtol=3e-2)), "case 3 mismatch"

    print("KERNEL_OK")
</pallas_src>

<mosaic_0001>
module attributes {stable_mosaic.version = 11 : i64} {
  func.func @_g_linear_kernel(%arg0: i32, %arg1: i32, %arg2: memref<16x256xf32, #tpu.memory_space<vmem>>, %arg3: memref<256x256xbf16, #tpu.memory_space<vmem>>, %arg4: memref<1x256xf32, #tpu.memory_space<vmem>>, %arg5: memref<16x256xf32, #tpu.memory_space<vmem>>) attributes {dimension_semantics = [#tpu.dimension_semantics<parallel>, #tpu.dimension_semantics<arbitrary>], iteration_bounds = array<i64: 1, 1>, scalar_prefetch = 0 : i64, scratch_operands = 0 : i64, tpu.core_type = #tpu.core_type<tc>, window_params = [{transform_indices = @transform_0, window_bounds = array<i64: 16, 256>}, {pipeline_mode = #tpu.pipeline_mode<synchronous>, transform_indices = @transform_1, window_bounds = array<i64: 256, 256>}, {pipeline_mode = #tpu.pipeline_mode<synchronous>, transform_indices = @transform_2, window_bounds = array<i64: 1, 256>}, {transform_indices = @transform_3, window_bounds = array<i64: 16, 256>}]} {
    %c0 = arith.constant 0 : index
    %c0_0 = arith.constant 0 : index
    %0 = vector.load %arg2[%c0, %c0_0] : memref<16x256xf32, #tpu.memory_space<vmem>>, vector<16x256xf32>
    %1 = arith.truncf %0 : vector<16x256xf32> to vector<16x256xbf16>
    %c0_1 = arith.constant 0 : index
    %c0_2 = arith.constant 0 : index
    %2 = vector.load %arg3[%c0_1, %c0_2] : memref<256x256xbf16, #tpu.memory_space<vmem>>, vector<256x256xbf16>
    %cst = arith.constant dense<0.000000e+00> : vector<16x256xf32>
    %3 = tpu.matmul %1, %2, %cst {dimension_numbers = #tpu.dot_dimension_numbers<[1], [0], [0], [1], [0, 0, 1, 1], [], []>} : vector<16x256xbf16>, vector<256x256xbf16>, vector<16x256xf32> -> vector<16x256xf32>
    %c0_3 = arith.constant 0 : index
    %c0_4 = arith.constant 0 : index
    %4 = vector.load %arg4[%c0_3, %c0_4] : memref<1x256xf32, #tpu.memory_space<vmem>>, vector<1x256xf32>
    %5 = vector.broadcast %4 : vector<1x256xf32> to vector<16x256xf32>
    %6 = arith.addf %3, %5 : vector<16x256xf32>
    %cst_5 = arith.constant 2.000000e-01 : f32
    %7 = vector.broadcast %cst_5 : f32 to vector<16x256xf32>
    %8 = arith.mulf %7, %6 : vector<16x256xf32>
    %9 = arith.maximumf %6, %8 : vector<16x256xf32>
    %10 = arith.mulf %9, %9 : vector<16x256xf32>
    %cst_6 = arith.constant dense<0.000000e+00> : vector<16xf32>
    %11 = vector.multi_reduction <add>, %10, %cst_6 [1] : vector<16x256xf32> to vector<16xf32>
    %12 = vector.shape_cast %11 : vector<16xf32> to vector<16x1xf32>
    %cst_7 = arith.constant 3.906250e-03 : f32
    %13 = vector.broadcast %cst_7 : f32 to vector<16x1xf32>
    %14 = arith.mulf %12, %13 : vector<16x1xf32>
    %cst_8 = arith.constant 9.99999993E-9 : f32
    %15 = vector.broadcast %cst_8 : f32 to vector<16x1xf32>
    %16 = arith.addf %14, %15 : vector<16x1xf32>
    %17 = math.rsqrt %16 : vector<16x1xf32>
    %18 = vector.broadcast %17 : vector<16x1xf32> to vector<16x256xf32>
    %19 = arith.mulf %9, %18 : vector<16x256xf32>
    %c0_9 = arith.constant 0 : index
    %c0_10 = arith.constant 0 : index
    %20 = vector.load %arg5[%c0_9, %c0_10] : memref<16x256xf32, #tpu.memory_space<vmem>>, vector<16x256xf32>
    tpu.vector_store %arg5[%c0_9, %c0_10], %19 {strides = array<i32>} : memref<16x256xf32, #tpu.memory_space<vmem>>, vector<16x256xf32>,
    return
  }
  func.func @transform_0(%arg0: i32, %arg1: i32) -> (i32, i32) {
    %c0_i32 = arith.constant 0 : i32
    return %arg0, %arg1 : i32, i32
  }
  func.func @transform_1(%arg0: i32, %arg1: i32) -> (i32, i32) {
    %c0_i32 = arith.constant 0 : i32
    %c0_i32_0 = arith.constant 0 : i32
    return %arg1, %c0_i32 : i32, i32
  }
  func.func @transform_2(%arg0: i32, %arg1: i32) -> (i32, i32) {
    %c0_i32 = arith.constant 0 : i32
    %c0_i32_0 = arith.constant 0 : i32
    %c0_i32_1 = arith.constant 0 : i32
    return %c0_i32, %c0_i32_0 : i32, i32
  }
  func.func @transform_3(%arg0: i32, %arg1: i32) -> (i32, i32) {
    %c0_i32 = arith.constant 0 : i32
    %c0_i32_0 = arith.constant 0 : i32
    return %arg0, %c0_i32 : i32, i32
  }
}

module attributes {stable_mosaic.version = 11 : i64} {
  func.func @_g_linear_kernel(%arg0: i32, %arg1: i32, %arg2: memref<16x256xf32, #tpu.memory_space<vmem>>, %arg3: memref<256x256xbf16, #tpu.memory_space<vmem>>, %arg4: memref<1x256xf32, #tpu.memory_space<vmem>>, %arg5: memref<16x256xf32, #tpu.memory_space<vmem>>) attributes {dimension_semantics = [#tpu.dimension_semantics<parallel>, #tpu.dimension_semantics<arbitrary>], iteration_bounds = array<i64: 1, 1>, scalar_prefetch = 0 : i64, scratch_operands = 0 : i64, tpu.core_type = #tpu.core_type<tc>, window_params = [{transform_indices = @transform_0, window_bounds = array<i64: 16, 256>}, {transform_indices = @transform_1, window_bounds = array<i64: 256, 256>}, {pipeline_mode = #tpu.pipeline_mode<synchronous>, transform_indices = @transform_2, window_bounds = array<i64: 1, 256>}, {transform_indices = @transform_3, window_bounds = array<i64: 16, 256>}]} {
    %c0 = arith.constant 0 : index
    %c0_0 = arith.constant 0 : index
    %0 = vector.load %arg2[%c0, %c0_0] : memref<16x256xf32, #tpu.memory_space<vmem>>, vector<16x256xf32>
    %1 = arith.truncf %0 : vector<16x256xf32> to vector<16x256xbf16>
    %c0_1 = arith.constant 0 : index
    %c0_2 = arith.constant 0 : index
    %2 = vector.load %arg3[%c0_1, %c0_2] : memref<256x256xbf16, #tpu.memory_space<vmem>>, vector<256x256xbf16>
    %cst = arith.constant dense<0.000000e+00> : vector<16x256xf32>
    %3 = tpu.matmul %1, %2, %cst {dimension_numbers = #tpu.dot_dimension_numbers<[1], [0], [0], [1], [0, 0, 1, 1], [], []>} : vector<16x256xbf16>, vector<256x256xbf16>, vector<16x256xf32> -> vector<16x256xf32>
    %c0_3 = arith.constant 0 : index
    %c0_4 = arith.constant 0 : index
    %4 = vector.load %arg4[%c0_3, %c0_4] : memref<1x256xf32, #tpu.memory_space<vmem>>, vector<1x256xf32>
    %5 = vector.broadcast %4 : vector<1x256xf32> to vector<16x256xf32>
    %6 = arith.addf %3, %5 : vector<16x256xf32>
    %cst_5 = arith.constant 2.000000e-01 : f32
    %7 = vector.broadcast %cst_5 : f32 to vector<16x256xf32>
    %8 = arith.mulf %7, %6 : vector<16x256xf32>
    %9 = arith.maximumf %6, %8 : vector<16x256xf32>
    %10 = arith.mulf %9, %9 : vector<16x256xf32>
    %cst_6 = arith.constant dense<0.000000e+00> : vector<16xf32>
    %11 = vector.multi_reduction <add>, %10, %cst_6 [1] : vector<16x256xf32> to vector<16xf32>
    %12 = vector.shape_cast %11 : vector<16xf32> to vector<16x1xf32>
    %cst_7 = arith.constant 3.906250e-03 : f32
    %13 = vector.broadcast %cst_7 : f32 to vector<16x1xf32>
    %14 = arith.mulf %12, %13 : vector<16x1xf32>
    %cst_8 = arith.constant 9.99999993E-9 : f32
    %15 = vector.broadcast %cst_8 : f32 to vector<16x1xf32>
    %16 = arith.addf %14, %15 : vector<16x1xf32>
    %17 = math.rsqrt %16 : vector<16x1xf32>
    %18 = vector.broadcast %17 : vector<16x1xf32> to vector<16x256xf32>
    %19 = arith.mulf %9, %18 : vector<16x256xf32>
    %c0_9 = arith.constant 0 : index
    %c0_10 = arith.constant 0 : index
    %20 = vector.load %arg5[%c0_9, %c0_10] : memref<16x256xf32, #tpu.memory_space<vmem>>, vector<16x256xf32>
    tpu.vector_store %arg5[%c0_9, %c0_10], %19 {strides = array<i32>} : memref<16x256xf32, #tpu.memory_space<vmem>>, vector<16x256xf32>,
    return
  }
  func.func @transform_0(%arg0: i32, %arg1: i32) -> (i32, i32) {
    %c0_i32 = arith.constant 0 : i32
    return %arg0, %arg1 : i32, i32
  }
  func.func @transform_1(%arg0: i32, %arg1: i32) -> (i32, i32) {
    %c0_i32 = arith.constant 0 : i32
    %c0_i32_0 = arith.constant 0 : i32
    return %arg1, %c0_i32 : i32, i32
  }
  func.func @transform_2(%arg0: i32, %arg1: i32) -> (i32, i32) {
    %c0_i32 = arith.constant 0 : i32
    %c0_i32_0 = arith.constant 0 : i32
    %c0_i32_1 = arith.constant 0 : i32
    return %c0_i32, %c0_i32_0 : i32, i32
  }
  func.func @transform_3(%arg0: i32, %arg1: i32) -> (i32, i32) {
    %c0_i32 = arith.constant 0 : i32
    %c0_i32_0 = arith.constant 0 : i32
    return %arg0, %c0_i32 : i32, i32
  }
}

</mosaic_0001>

<llo_original>
// kernel: tpu_custom_call.1
$region0: #{tpu_custom_call.1}
  #allocation0 [shape = 'u32[]', space=smem, size = 0x4, offset = 0x4, fixed_abs, tag = 'smem constant byte address 0x4 - core index']
  #allocation1 [shape = 'u32[144,128]{1,0:T(1,128)}', space=vmem, size = 0x12000, scoped, tag = 'internal scratch']
  %s0 = inlined_call_operand.hbm [shape: f32[16,256], index: 0, kind: input, shape index: {}]
  %s1 = inlined_call_operand.hbm [shape: bf16[256,256], index: 1, kind: input, shape index: {}]
  %s2 = inlined_call_operand.vmem [shape: f32[1,256], index: 2, kind: input, shape index: {}]
  %s3 = inlined_call_operand.hbm [shape: f32[16,256], index: 3, kind: output, shape index: {}]
  %s4 = sld [smem:[#allocation0]]
  $region30: #{tpu_custom_call.1} parent=0
    _
  %s6 = ssub.s32 1, %s4
  %s7 = scalar_select 0, %s6, %s4
  $region1: #{tpu_custom_call.1} parent=0
    #allocation2 [shape = 'u8[16384]{0}', space=vmem, size = 0x4000, scoped, tag = 'input window, operand 0, single buffered']
    #allocation3 [shape = 's32[1]{0}', space=sflag, size = 0x4, scoped, tag = 'scoped memory for tpu_custom_call.1']
    #allocation4 [shape = 's32[1]{0}', space=sflag, size = 0x4, scoped, tag = 'scoped memory for tpu_custom_call.1']
    #allocation5 [shape = 'u8[131072]{0}', space=vmem, size = 0x20000, scoped, tag = 'input window, operand 1, single buffered']
    #allocation6 [shape = 's32[1]{0}', space=sflag, size = 0x4, scoped, tag = 'scoped memory for tpu_custom_call.1']
    #allocation7 [shape = 'u8[16384]{0}', space=vmem, size = 0x4000, scoped, tag = 'output window, operand 0, single buffered']
    %8 = vsyncpa [#allocation3], 0
    %9 = vsyncpa [#allocation6], 0
    %10 = vsyncpa [#allocation4], 0
    // Predicated region
    $region2: #{tpu_custom_call.1} parent=1 // pred_check
      _
    $region3: #{tpu_custom_call.1} parent=1 // pred_check_branch
      %12 = sbr.rel (0) target = $region5
    $region4: #{tpu_custom_call.1} parent=1 // pred_region
      %s14 = ssub.s32 512, 512
      %15 = vsyncadd [#allocation3], %s14
      %s16 = sshll.u32 [#allocation2], 4
      %s17 = int_to_ptr.vmem [resolvable:$true] %s16
      %22 = dma.hbm_to_vmem [thread:$0]  %s0, 512, %s17, [#allocation3], 256, 256, 16
    $region5: #{tpu_custom_call.1} parent=1 // pred_fallthru
      _
    // Predicated region
    $region6: #{tpu_custom_call.1} parent=1 // pred_check
      _
    $region7: #{tpu_custom_call.1} parent=1 // pred_check_branch
      %24 = sbr.rel (0) target = $region9
    $region8: #{tpu_custom_call.1} parent=1 // pred_region
      %s26 = ssub.s32 4096, 4096
      %27 = vsyncadd [#allocation6], %s26
      %s28 = sshll.u32 [#allocation5], 4
      %s29 = int_to_ptr.vmem [resolvable:$true] %s28
      %34 = dma.hbm_to_vmem [thread:$0]  %s1, 4096, %s29, [#allocation6], 128, 128, 8
    $region9: #{tpu_custom_call.1} parent=1 // pred_fallthru
      _
    // Predicated region
    $region10: #{tpu_custom_call.1} parent=1 // pred_check
      _
    $region11: #{tpu_custom_call.1} parent=1 // pred_check_branch
      %36 = sbr.rel (0) target = $region13
    $region12: #{tpu_custom_call.1} parent=1 // pred_region
      _
    $region13: #{tpu_custom_call.1} parent=1 // pred_fallthru
      _
    // Predicated region
    $region14: #{tpu_custom_call.1} parent=1 // pred_check
      _
    $region15: #{tpu_custom_call.1} parent=1 // pred_check_branch
      %38 = sbr.rel (0) target = $region17
    $region16: #{tpu_custom_call.1} parent=1 // pred_region
      %39 = dma.done [#allocation3], 512
    $region17: #{tpu_custom_call.1} parent=1 // pred_fallthru
      _
    // Predicated region
    $region18: #{tpu_custom_call.1} parent=1 // pred_check
      _
    $region19: #{tpu_custom_call.1} parent=1 // pred_check_branch
      %41 = sbr.rel (0) target = $region21
    $region20: #{tpu_custom_call.1} parent=1 // pred_region
      %42 = dma.done [#allocation6], 4096
    $region21: #{tpu_custom_call.1} parent=1 // pred_fallthru
      _
    %v43 = vld [vmem:[#allocation2] sm:$0xff]
    %v44 = vld [vmem:[#allocation2 + $0x8] sm:$0xff]
    %v45 = vld [vmem:[#allocation2 + $0x10] sm:$0xff]
    %v46 = vld [vmem:[#allocation2 + $0x18] sm:$0xff]
    %v47 = vpack.c.bf16 %v45, %v43
    %v48 = vpack.c.bf16 %v46, %v44
    %v49 = vld [vmem:[#allocation5] sm:$0xff]
    %v50 = vld [vmem:[#allocation5 + $0x8] sm:$0xff]
    %v51 = vld [vmem:[#allocation5 + $0x10] sm:$0xff]
    %v52 = vld [vmem:[#allocation5 + $0x18] sm:$0xff]
    %v53 = vld [vmem:[#allocation5 + $0x20] sm:$0xff]
    %v54 = vld [vmem:[#allocation5 + $0x28] sm:$0xff]
    %v55 = vld [vmem:[#allocation5 + $0x30] sm:$0xff]
    %v56 = vld [vmem:[#allocation5 + $0x38] sm:$0xff]
    %v57 = vld [vmem:[#allocation5 + $0x40] sm:$0xff]
    %v58 = vld [vmem:[#allocation5 + $0x48] sm:$0xff]
    %v59 = vld [vmem:[#allocation5 + $0x50] sm:$0xff]
    %v60 = vld [vmem:[#allocation5 + $0x58] sm:$0xff]
    %v61 = vld [vmem:[#allocation5 + $0x60] sm:$0xff]
    %v62 = vld [vmem:[#allocation5 + $0x68] sm:$0xff]
    %v63 = vld [vmem:[#allocation5 + $0x70] sm:$0xff]
    %v64 = vld [vmem:[#allocation5 + $0x78] sm:$0xff]
    %v65 = vld [vmem:[#allocation5 + $0x80] sm:$0xff]
    %v66 = vld [vmem:[#allocation5 + $0x88] sm:$0xff]
    %v67 = vld [vmem:[#allocation5 + $0x90] sm:$0xff]
    %v68 = vld [vmem:[#allocation5 + $0x98] sm:$0xff]
    %v69 = vld [vmem:[#allocation5 + $0xa0] sm:$0xff]
    %v70 = vld [vmem:[#allocation5 + $0xa8] sm:$0xff]
    %v71 = vld [vmem:[#allocation5 + $0xb0] sm:$0xff]
    %v72 = vld [vmem:[#allocation5 + $0xb8] sm:$0xff]
    %v73 = vld [vmem:[#allocation5 + $0xc0] sm:$0xff]
    %v74 = vld [vmem:[#allocation5 + $0xc8] sm:$0xff]
    %v75 = vld [vmem:[#allocation5 + $0xd0] sm:$0xff]
    %v76 = vld [vmem:[#allocation5 + $0xd8] sm:$0xff]
    %v77 = vld [vmem:[#allocation5 + $0xe0] sm:$0xff]
    %v78 = vld [vmem:[#allocation5 + $0xe8] sm:$0xff]
    %v79 = vld [vmem:[#allocation5 + $0xf0] sm:$0xff]
    %v80 = vld [vmem:[#allocation5 + $0xf8] sm:$0xff]
    %v81 = vld [vmem:[%s2] sm:$0x3]
    %v83 = vlaneseq
    %v84 = vshrl.u32 %v83, 7
    %v85 = vsub.s32 0, %v84
    %v86 = vrot.slane %v81, %v85
    %v87 = vlaneseq
    %v88 = vshrl.u32 %v87, 7
    %v89 = vsub.s32 1, %v88
    %v90 = vrot.slane %v81, %v89
    %v125 = vunpack.c.l.b16 %v49
    %v126 = vunpack.c.h.b16 %v49
    %v127 = vunpack.c.l.b16 %v50
    %v128 = vunpack.c.h.b16 %v50
    %v129 = vunpack.c.l.b16 %v51
    %v130 = vunpack.c.h.b16 %v51
    %v131 = vunpack.c.l.b16 %v52
    %v132 = vunpack.c.h.b16 %v52
    %v133 = vunpack.c.l.b16 %v53
    %v134 = vunpack.c.h.b16 %v53
    %v135 = vunpack.c.l.b16 %v54
    %v136 = vunpack.c.h.b16 %v54
    %v137 = vunpack.c.l.b16 %v55
    %v138 = vunpack.c.h.b16 %v55
    %v139 = vunpack.c.l.b16 %v56
    %v140 = vunpack.c.h.b16 %v56
    %v141 = vunpack.c.l.b16 %v57
    %v142 = vunpack.c.h.b16 %v57
    %v143 = vunpack.c.l.b16 %v58
    %v144 = vunpack.c.h.b16 %v58
    %v145 = vunpack.c.l.b16 %v59
    %v146 = vunpack.c.h.b16 %v59
    %v147 = vunpack.c.l.b16 %v60
    %v148 = vunpack.c.h.b16 %v60
    %v149 = vunpack.c.l.b16 %v61
    %v150 = vunpack.c.h.b16 %v61
    %v151 = vunpack.c.l.b16 %v62
    %v152 = vunpack.c.h.b16 %v62
    %v153 = vunpack.c.l.b16 %v63
    %v154 = vunpack.c.h.b16 %v63
    %v155 = vunpack.c.l.b16 %v64
    %v156 = vunpack.c.h.b16 %v64
    %v157 = vunpack.c.l.b16 %v65
    %v158 = vunpack.c.h.b16 %v65
    %v159 = vunpack.c.l.b16 %v66
    %v160 = vunpack.c.h.b16 %v66
    %v161 = vunpack.c.l.b16 %v67
    %v162 = vunpack.c.h.b16 %v67
    %v163 = vunpack.c.l.b16 %v68
    %v164 = vunpack.c.h.b16 %v68
    %v165 = vunpack.c.l.b16 %v69
    %v166 = vunpack.c.h.b16 %v69
    %v167 = vunpack.c.l.b16 %v70
    %v168 = vunpack.c.h.b16 %v70
    %v169 = vunpack.c.l.b16 %v71
    %v170 = vunpack.c.h.b16 %v71
    %v171 = vunpack.c.l.b16 %v72
    %v172 = vunpack.c.h.b16 %v72
    %v173 = vunpack.c.l.b16 %v73
    %v174 = vunpack.c.h.b16 %v73
    %v175 = vunpack.c.l.b16 %v74
    %v176 = vunpack.c.h.b16 %v74
    %v177 = vunpack.c.l.b16 %v75
    %v178 = vunpack.c.h.b16 %v75
    %v179 = vunpack.c.l.b16 %v76
    %v180 = vunpack.c.h.b16 %v76
    %v181 = vunpack.c.l.b16 %v77
    %v182 = vunpack.c.h.b16 %v77
    %v183 = vunpack.c.l.b16 %v78
    %v184 = vunpack.c.h.b16 %v78
    %v185 = vunpack.c.l.b16 %v79
    %v186 = vunpack.c.h.b16 %v79
    %v187 = vunpack.c.l.b16 %v80
    %v188 = vunpack.c.h.b16 %v80
    %v189 = vpack.c.b16 %v127, %v125
    %v190 = vpack.c.b16 %v128, %v126
    %v191 = vpack.c.b16 %v131, %v129
    %v192 = vpack.c.b16 %v132, %v130
    %v193 = vpack.c.b16 %v135, %v133
    %v194 = vpack.c.b16 %v136, %v134
    %v195 = vpack.c.b16 %v139, %v137
    %v196 = vpack.c.b16 %v140, %v138
    %v197 = vpack.c.b16 %v143, %v141
    %v198 = vpack.c.b16 %v144, %v142
    %v199 = vpack.c.b16 %v147, %v145
    %v200 = vpack.c.b16 %v148, %v146
    %v201 = vpack.c.b16 %v151, %v149
    %v202 = vpack.c.b16 %v152, %v150
    %v203 = vpack.c.b16 %v155, %v153
    %v204 = vpack.c.b16 %v156, %v154
    %v205 = vpack.c.b16 %v159, %v157
    %v206 = vpack.c.b16 %v160, %v158
    %v207 = vpack.c.b16 %v163, %v161
    %v208 = vpack.c.b16 %v164, %v162
    %v209 = vpack.c.b16 %v167, %v165
    %v210 = vpack.c.b16 %v168, %v166
    %v211 = vpack.c.b16 %v171, %v169
    %v212 = vpack.c.b16 %v172, %v170
    %v213 = vpack.c.b16 %v175, %v173
    %v214 = vpack.c.b16 %v176, %v174
    %v215 = vpack.c.b16 %v179, %v177
    %v216 = vpack.c.b16 %v180, %v178
    %v217 = vpack.c.b16 %v183, %v181
    %v218 = vpack.c.b16 %v184, %v182
    %v219 = vpack.c.b16 %v187, %v185
    %v220 = vpack.c.b16 %v188, %v186
    %253 = vmatprep.subr.bf16.mxu0 %v190
    %254 = vmatpush1.bf16.msra.mxu0 %v189
    %255 = vmatprep.subr.bf16.mxu0 %v192
    %256 = vmatpush1.bf16.msra.mxu0 %v191
    %257 = vmatprep.subr.bf16.mxu0 %v194
    %258 = vmatpush1.bf16.msra.mxu0 %v193
    %259 = vmatprep.subr.bf16.mxu0 %v196
    %260 = vmatpush1.bf16.msra.mxu0 %v195
    %261 = vmatprep.subr.bf16.mxu0 %v198
    %262 = vmatpush1.bf16.msra.mxu0 %v197
    %263 = vmatprep.subr.bf16.mxu0 %v200
    %264 = vmatpush1.bf16.msra.mxu0 %v199
    %265 = vmatprep.subr.bf16.mxu0 %v202
    %266 = vmatpush1.bf16.msra.mxu0 %v201
    %267 = vmatprep.subr.bf16.mxu0 %v204
    %268 = vmatpush1.bf16.msra.mxu0 %v203
    %269 = vmatprep.subr.bf16.mxu0 %v206
    %270 = vmatpush1.bf16.msra.mxu0 %v205
    %271 = vmatprep.subr.bf16.mxu0 %v208
    %272 = vmatpush1.bf16.msra.mxu0 %v207
    %273 = vmatprep.subr.bf16.mxu0 %v210
    %274 = vmatpush1.bf16.msra.mxu0 %v209
    %275 = vmatprep.subr.bf16.mxu0 %v212
    %276 = vmatpush1.bf16.msra.mxu0 %v211
    %277 = vmatprep.subr.bf16.mxu0 %v214
    %278 = vmatpush1.bf16.msra.mxu0 %v213
    %279 = vmatprep.subr.bf16.mxu0 %v216
    %280 = vmatpush1.bf16.msra.mxu0 %v215
    %281 = vmatprep.subr.bf16.mxu0 %v218
    %282 = vmatpush1.bf16.msra.mxu0 %v217
    %283 = vmatprep.subr.bf16.mxu0 %v220
    %284 = vmatpush1.bf16.msra.mxu0 %v219
    %285 = vmatprep.mubr.bf16.mxu0 %v48
    %286 = vmatmul.mubr.bf16.gmra.mrb[0].mxu0 %v47
    %v287 = vpop.f32.mrb[0].mxu0
    %v288 = vadd.f32 %v86, %v287
    %v289 = vpop.f32.mrb[0].mxu0
    %v290 = vadd.f32 %v90, %v289
    %v291 = vpop.f32.mrb[0].mxu0
    %v292 = vadd.f32 %v86, %v291
    %v293 = vpop.f32.mrb[0].mxu0
    %v294 = vadd.f32 %v90, %v293
    %295 = vdwg.mxu0
    %v296 = vmul.f32 %v288, 0.2
    %v297 = vmul.f32 %v290, 0.2
    %v298 = vmul.f32 %v292, 0.2
    %v299 = vmul.f32 %v294, 0.2
    %v300 = vmax.f32 %v288, %v296
    %v301 = vmax.f32 %v290, %v297
    %v302 = vmax.f32 %v292, %v298
    %v303 = vmax.f32 %v294, %v299
    %v304 = vmul.f32 %v300, %v300
    %v305 = vmul.f32 %v301, %v301
    %v306 = vmul.f32 %v302, %v302
    %v307 = vmul.f32 %v303, %v303
    %v308 = vadd.f32 %v304, %v305
    %309 = vadd.xlane.f32.xlu0 %v308
    %v310 = vpop.xlane.xlu0 %309
    %v311 = vadd.f32 %v306, %v307
    %312 = vadd.xlane.f32.xlu0 %v311
    %v313 = vpop.xlane.xlu0 %312
    %v314 = vmul.f32 %v310, 0.00390625
    %v315 = vmul.f32 %v313, 0.00390625
    %v316 = vadd.f32 %v314, 1e-08
    %v317 = vadd.f32 %v315, 1e-08
    %v318 = vrsqrt.pop %v316
    %v319 = vrsqrt.pop %v317
    %v320 = vmul.f32 %v300, %v318
    %v321 = vmul.f32 %v301, %v318
    %v322 = vmul.f32 %v302, %v319
    %v323 = vmul.f32 %v303, %v319
    %324 = vst [vmem:[#allocation7] sm:$0xff] %v320
    %325 = vst [vmem:[#allocation7 + $0x8] sm:$0xff] %v321
    %326 = vst [vmem:[#allocation7 + $0x10] sm:$0xff] %v322
    %327 = vst [vmem:[#allocation7 + $0x18] sm:$0xff] %v323
    // Predicated region
    $region22: #{tpu_custom_call.1} parent=1 // pred_check
      _
    $region23: #{tpu_custom_call.1} parent=1 // pred_check_branch
      %329 = sbr.rel (0) target = $region25
    $region24: #{tpu_custom_call.1} parent=1 // pred_region
      %s331 = ssub.s32 512, 512
      %332 = vsyncadd [#allocation4], %s331
      %s333 = sshll.u32 [#allocation7], 4
      %s334 = int_to_ptr.vmem [resolvable:$true] %s333
      %339 = dma.vmem_to_hbm [thread:$0]  %s334, 512, %s3, [#allocation4], 256, 256, 16
    $region25: #{tpu_custom_call.1} parent=1 // pred_fallthru
      _
    // Predicated region
    $region26: #{tpu_custom_call.1} parent=1 // pred_check
      _
    $region27: #{tpu_custom_call.1} parent=1 // pred_check_branch
      %341 = sbr.rel (0) target = $region29
    $region28: #{tpu_custom_call.1} parent=1 // pred_region
      %342 = dma.done [#allocation4], 512
    $region29: #{tpu_custom_call.1} parent=1 // pred_fallthru
      _
    %343 = vsyncpa [#allocation3], 1
    %344 = vsyncpa [#allocation6], 1
    %345 = vsyncpa [#allocation4], 1

// kernel: tpu_custom_call.1
$region0: #{tpu_custom_call.1}
  #allocation0 [shape = 'u32[]', space=smem, size = 0x4, offset = 0x4, fixed_abs, tag = 'smem constant byte address 0x4 - core index']
  #allocation1 [shape = 'u32[144,128]{1,0:T(1,128)}', space=vmem, size = 0x12000, scoped, tag = 'internal scratch']
  %s0 = inlined_call_operand.hbm [shape: f32[16,256], index: 0, kind: input, shape index: {}]
  %s1 = inlined_call_operand.hbm [shape: bf16[256,256], index: 1, kind: input, shape index: {}]
  %s2 = inlined_call_operand.vmem [shape: f32[1,256], index: 2, kind: input, shape index: {}]
  %s3 = inlined_call_operand.hbm [shape: f32[16,256], index: 3, kind: output, shape index: {}]
  %s4 = sld [smem:[#allocation0]]
  $region30: #{tpu_custom_call.1} parent=0
    _
  %s6 = ssub.s32 1, %s4
  %s7 = scalar_select 0, %s6, %s4
  $region1: #{tpu_custom_call.1} parent=0
    #allocation2 [shape = 'u8[16384]{0}', space=vmem, size = 0x4000, scoped, tag = 'input window, operand 0, single buffered']
    #allocation3 [shape = 's32[1]{0}', space=sflag, size = 0x4, scoped, tag = 'scoped memory for tpu_custom_call.1']
    #allocation4 [shape = 's32[1]{0}', space=sflag, size = 0x4, scoped, tag = 'scoped memory for tpu_custom_call.1']
    #allocation5 [shape = 'u8[131072]{0}', space=vmem, size = 0x20000, scoped, tag = 'input window, operand 1, single buffered']
    #allocation6 [shape = 's32[1]{0}', space=sflag, size = 0x4, scoped, tag = 'scoped memory for tpu_custom_call.1']
    #allocation7 [shape = 'u8[16384]{0}', space=vmem, size = 0x4000, scoped, tag = 'output window, operand 0, single buffered']
    %8 = vsyncpa [#allocation3], 0
    %9 = vsyncpa [#allocation6], 0
    %10 = vsyncpa [#allocation4], 0
    // Predicated region
    $region2: #{tpu_custom_call.1} parent=1 // pred_check
      _
    $region3: #{tpu_custom_call.1} parent=1 // pred_check_branch
      %12 = sbr.rel (0) target = $region5
    $region4: #{tpu_custom_call.1} parent=1 // pred_region
      %s14 = ssub.s32 512, 512
      %15 = vsyncadd [#allocation3], %s14
      %s16 = sshll.u32 [#allocation2], 4
      %s17 = int_to_ptr.vmem [resolvable:$true] %s16
      %22 = dma.hbm_to_vmem [thread:$0]  %s0, 512, %s17, [#allocation3], 256, 256, 16
    $region5: #{tpu_custom_call.1} parent=1 // pred_fallthru
      _
    // Predicated region
    $region6: #{tpu_custom_call.1} parent=1 // pred_check
      _
    $region7: #{tpu_custom_call.1} parent=1 // pred_check_branch
      %24 = sbr.rel (0) target = $region9
    $region8: #{tpu_custom_call.1} parent=1 // pred_region
      %s26 = ssub.s32 4096, 4096
      %27 = vsyncadd [#allocation6], %s26
      %s28 = sshll.u32 [#allocation5], 4
      %s29 = int_to_ptr.vmem [resolvable:$true] %s28
      %34 = dma.hbm_to_vmem [thread:$0]  %s1, 4096, %s29, [#allocation6], 128, 128, 8
    $region9: #{tpu_custom_call.1} parent=1 // pred_fallthru
      _
    // Predicated region
    $region10: #{tpu_custom_call.1} parent=1 // pred_check
      _
    $region11: #{tpu_custom_call.1} parent=1 // pred_check_branch
      %36 = sbr.rel (0) target = $region13
    $region12: #{tpu_custom_call.1} parent=1 // pred_region
      _
    $region13: #{tpu_custom_call.1} parent=1 // pred_fallthru
      _
    // Predicated region
    $region14: #{tpu_custom_call.1} parent=1 // pred_check
      _
    $region15: #{tpu_custom_call.1} parent=1 // pred_check_branch
      %38 = sbr.rel (0) target = $region17
    $region16: #{tpu_custom_call.1} parent=1 // pred_region
      %39 = dma.done [#allocation3], 512
    $region17: #{tpu_custom_call.1} parent=1 // pred_fallthru
      _
    // Predicated region
    $region18: #{tpu_custom_call.1} parent=1 // pred_check
      _
    $region19: #{tpu_custom_call.1} parent=1 // pred_check_branch
      %41 = sbr.rel (0) target = $region21
    $region20: #{tpu_custom_call.1} parent=1 // pred_region
      %42 = dma.done [#allocation6], 4096
    $region21: #{tpu_custom_call.1} parent=1 // pred_fallthru
      _
    %v43 = vld [vmem:[#allocation2] sm:$0xff]
    %v44 = vld [vmem:[#allocation2 + $0x8] sm:$0xff]
    %v45 = vld [vmem:[#allocation2 + $0x10] sm:$0xff]
    %v46 = vld [vmem:[#allocation2 + $0x18] sm:$0xff]
    %v47 = vpack.c.bf16 %v45, %v43
    %v48 = vpack.c.bf16 %v46, %v44
    %v49 = vld [vmem:[#allocation5] sm:$0xff]
    %v50 = vld [vmem:[#allocation5 + $0x8] sm:$0xff]
    %v51 = vld [vmem:[#allocation5 + $0x10] sm:$0xff]
    %v52 = vld [vmem:[#allocation5 + $0x18] sm:$0xff]
    %v53 = vld [vmem:[#allocation5 + $0x20] sm:$0xff]
    %v54 = vld [vmem:[#allocation5 + $0x28] sm:$0xff]
    %v55 = vld [vmem:[#allocation5 + $0x30] sm:$0xff]
    %v56 = vld [vmem:[#allocation5 + $0x38] sm:$0xff]
    %v57 = vld [vmem:[#allocation5 + $0x40] sm:$0xff]
    %v58 = vld [vmem:[#allocation5 + $0x48] sm:$0xff]
    %v59 = vld [vmem:[#allocation5 + $0x50] sm:$0xff]
    %v60 = vld [vmem:[#allocation5 + $0x58] sm:$0xff]
    %v61 = vld [vmem:[#allocation5 + $0x60] sm:$0xff]
    %v62 = vld [vmem:[#allocation5 + $0x68] sm:$0xff]
    %v63 = vld [vmem:[#allocation5 + $0x70] sm:$0xff]
    %v64 = vld [vmem:[#allocation5 + $0x78] sm:$0xff]
    %v65 = vld [vmem:[#allocation5 + $0x80] sm:$0xff]
    %v66 = vld [vmem:[#allocation5 + $0x88] sm:$0xff]
    %v67 = vld [vmem:[#allocation5 + $0x90] sm:$0xff]
    %v68 = vld [vmem:[#allocation5 + $0x98] sm:$0xff]
    %v69 = vld [vmem:[#allocation5 + $0xa0] sm:$0xff]
    %v70 = vld [vmem:[#allocation5 + $0xa8] sm:$0xff]
    %v71 = vld [vmem:[#allocation5 + $0xb0] sm:$0xff]
    %v72 = vld [vmem:[#allocation5 + $0xb8] sm:$0xff]
    %v73 = vld [vmem:[#allocation5 + $0xc0] sm:$0xff]
    %v74 = vld [vmem:[#allocation5 + $0xc8] sm:$0xff]
    %v75 = vld [vmem:[#allocation5 + $0xd0] sm:$0xff]
    %v76 = vld [vmem:[#allocation5 + $0xd8] sm:$0xff]
    %v77 = vld [vmem:[#allocation5 + $0xe0] sm:$0xff]
    %v78 = vld [vmem:[#allocation5 + $0xe8] sm:$0xff]
    %v79 = vld [vmem:[#allocation5 + $0xf0] sm:$0xff]
    %v80 = vld [vmem:[#allocation5 + $0xf8] sm:$0xff]
    %v81 = vld [vmem:[%s2] sm:$0x3]
    %v83 = vlaneseq
    %v84 = vshrl.u32 %v83, 7
    %v85 = vsub.s32 0, %v84
    %v86 = vrot.slane %v81, %v85
    %v87 = vlaneseq
    %v88 = vshrl.u32 %v87, 7
    %v89 = vsub.s32 1, %v88
    %v90 = vrot.slane %v81, %v89
    %v125 = vunpack.c.l.b16 %v49
    %v126 = vunpack.c.h.b16 %v49
    %v127 = vunpack.c.l.b16 %v50
    %v128 = vunpack.c.h.b16 %v50
    %v129 = vunpack.c.l.b16 %v51
    %v130 = vunpack.c.h.b16 %v51
    %v131 = vunpack.c.l.b16 %v52
    %v132 = vunpack.c.h.b16 %v52
    %v133 = vunpack.c.l.b16 %v53
    %v134 = vunpack.c.h.b16 %v53
    %v135 = vunpack.c.l.b16 %v54
    %v136 = vunpack.c.h.b16 %v54
    %v137 = vunpack.c.l.b16 %v55
    %v138 = vunpack.c.h.b16 %v55
    %v139 = vunpack.c.l.b16 %v56
    %v140 = vunpack.c.h.b16 %v56
    %v141 = vunpack.c.l.b16 %v57
    %v142 = vunpack.c.h.b16 %v57
    %v143 = vunpack.c.l.b16 %v58
    %v144 = vunpack.c.h.b16 %v58
    %v145 = vunpack.c.l.b16 %v59
    %v146 = vunpack.c.h.b16 %v59
    %v147 = vunpack.c.l.b16 %v60
    %v148 = vunpack.c.h.b16 %v60
    %v149 = vunpack.c.l.b16 %v61
    %v150 = vunpack.c.h.b16 %v61
    %v151 = vunpack.c.l.b16 %v62
    %v152 = vunpack.c.h.b16 %v62
    %v153 = vunpack.c.l.b16 %v63
    %v154 = vunpack.c.h.b16 %v63
    %v155 = vunpack.c.l.b16 %v64
    %v156 = vunpack.c.h.b16 %v64
    %v157 = vunpack.c.l.b16 %v65
    %v158 = vunpack.c.h.b16 %v65
    %v159 = vunpack.c.l.b16 %v66
    %v160 = vunpack.c.h.b16 %v66
    %v161 = vunpack.c.l.b16 %v67
    %v162 = vunpack.c.h.b16 %v67
    %v163 = vunpack.c.l.b16 %v68
    %v164 = vunpack.c.h.b16 %v68
    %v165 = vunpack.c.l.b16 %v69
    %v166 = vunpack.c.h.b16 %v69
    %v167 = vunpack.c.l.b16 %v70
    %v168 = vunpack.c.h.b16 %v70
    %v169 = vunpack.c.l.b16 %v71
    %v170 = vunpack.c.h.b16 %v71
    %v171 = vunpack.c.l.b16 %v72
    %v172 = vunpack.c.h.b16 %v72
    %v173 = vunpack.c.l.b16 %v73
    %v174 = vunpack.c.h.b16 %v73
    %v175 = vunpack.c.l.b16 %v74
    %v176 = vunpack.c.h.b16 %v74
    %v177 = vunpack.c.l.b16 %v75
    %v178 = vunpack.c.h.b16 %v75
    %v179 = vunpack.c.l.b16 %v76
    %v180 = vunpack.c.h.b16 %v76
    %v181 = vunpack.c.l.b16 %v77
    %v182 = vunpack.c.h.b16 %v77
    %v183 = vunpack.c.l.b16 %v78
    %v184 = vunpack.c.h.b16 %v78
    %v185 = vunpack.c.l.b16 %v79
    %v186 = vunpack.c.h.b16 %v79
    %v187 = vunpack.c.l.b16 %v80
    %v188 = vunpack.c.h.b16 %v80
    %v189 = vpack.c.b16 %v127, %v125
    %v190 = vpack.c.b16 %v128, %v126
    %v191 = vpack.c.b16 %v131, %v129
    %v192 = vpack.c.b16 %v132, %v130
    %v193 = vpack.c.b16 %v135, %v133
    %v194 = vpack.c.b16 %v136, %v134
    %v195 = vpack.c.b16 %v139, %v137
    %v196 = vpack.c.b16 %v140, %v138
    %v197 = vpack.c.b16 %v143, %v141
    %v198 = vpack.c.b16 %v144, %v142
    %v199 = vpack.c.b16 %v147, %v145
    %v200 = vpack.c.b16 %v148, %v146
    %v201 = vpack.c.b16 %v151, %v149
    %v202 = vpack.c.b16 %v152, %v150
    %v203 = vpack.c.b16 %v155, %v153
    %v204 = vpack.c.b16 %v156, %v154
    %v205 = vpack.c.b16 %v159, %v157
    %v206 = vpack.c.b16 %v160, %v158
    %v207 = vpack.c.b16 %v163, %v161
    %v208 = vpack.c.b16 %v164, %v162
    %v209 = vpack.c.b16 %v167, %v165
    %v210 = vpack.c.b16 %v168, %v166
    %v211 = vpack.c.b16 %v171, %v169
    %v212 = vpack.c.b16 %v172, %v170
    %v213 = vpack.c.b16 %v175, %v173
    %v214 = vpack.c.b16 %v176, %v174
    %v215 = vpack.c.b16 %v179, %v177
    %v216 = vpack.c.b16 %v180, %v178
    %v217 = vpack.c.b16 %v183, %v181
    %v218 = vpack.c.b16 %v184, %v182
    %v219 = vpack.c.b16 %v187, %v185
    %v220 = vpack.c.b16 %v188, %v186
    %253 = vmatprep.subr.bf16.mxu0 %v190
    %254 = vmatpush1.bf16.msra.mxu0 %v189
    %255 = vmatprep.subr.bf16.mxu0 %v192
    %256 = vmatpush1.bf16.msra.mxu0 %v191
    %257 = vmatprep.subr.bf16.mxu0 %v194
    %258 = vmatpush1.bf16.msra.mxu0 %v193
    %259 = vmatprep.subr.bf16.mxu0 %v196
    %260 = vmatpush1.bf16.msra.mxu0 %v195
    %261 = vmatprep.subr.bf16.mxu0 %v198
    %262 = vmatpush1.bf16.msra.mxu0 %v197
    %263 = vmatprep.subr.bf16.mxu0 %v200
    %264 = vmatpush1.bf16.msra.mxu0 %v199
    %265 = vmatprep.subr.bf16.mxu0 %v202
    %266 = vmatpush1.bf16.msra.mxu0 %v201
    %267 = vmatprep.subr.bf16.mxu0 %v204
    %268 = vmatpush1.bf16.msra.mxu0 %v203
    %269 = vmatprep.subr.bf16.mxu0 %v206
    %270 = vmatpush1.bf16.msra.mxu0 %v205
    %271 = vmatprep.subr.bf16.mxu0 %v208
    %272 = vmatpush1.bf16.msra.mxu0 %v207
    %273 = vmatprep.subr.bf16.mxu0 %v210
    %274 = vmatpush1.bf16.msra.mxu0 %v209
    %275 = vmatprep.subr.bf16.mxu0 %v212
    %276 = vmatpush1.bf16.msra.mxu0 %v211
    %277 = vmatprep.subr.bf16.mxu0 %v214
    %278 = vmatpush1.bf16.msra.mxu0 %v213
    %279 = vmatprep.subr.bf16.mxu0 %v216
    %280 = vmatpush1.bf16.msra.mxu0 %v215
    %281 = vmatprep.subr.bf16.mxu0 %v218
    %282 = vmatpush1.bf16.msra.mxu0 %v217
    %283 = vmatprep.subr.bf16.mxu0 %v220
    %284 = vmatpush1.bf16.msra.mxu0 %v219
    %285 = vmatprep.mubr.bf16.mxu0 %v48
    %286 = vmatmul.mubr.bf16.gmra.mrb[0].mxu0 %v47
    %v287 = vpop.f32.mrb[0].mxu0
    %v288 = vadd.f32 %v86, %v287
    %v289 = vpop.f32.mrb[0].mxu0
    %v290 = vadd.f32 %v90, %v289
    %v291 = vpop.f32.mrb[0].mxu0
    %v292 = vadd.f32 %v86, %v291
    %v293 = vpop.f32.mrb[0].mxu0
    %v294 = vadd.f32 %v90, %v293
    %295 = vdwg.mxu0
    %v296 = vmul.f32 %v288, 0.2
    %v297 = vmul.f32 %v290, 0.2
    %v298 = vmul.f32 %v292, 0.2
    %v299 = vmul.f32 %v294, 0.2
    %v300 = vmax.f32 %v288, %v296
    %v301 = vmax.f32 %v290, %v297
    %v302 = vmax.f32 %v292, %v298
    %v303 = vmax.f32 %v294, %v299
    %v304 = vmul.f32 %v300, %v300
    %v305 = vmul.f32 %v301, %v301
    %v306 = vmul.f32 %v302, %v302
    %v307 = vmul.f32 %v303, %v303
    %v308 = vadd.f32 %v304, %v305
    %309 = vadd.xlane.f32.xlu0 %v308
    %v310 = vpop.xlane.xlu0 %309
    %v311 = vadd.f32 %v306, %v307
    %312 = vadd.xlane.f32.xlu0 %v311
    %v313 = vpop.xlane.xlu0 %312
    %v314 = vmul.f32 %v310, 0.00390625
    %v315 = vmul.f32 %v313, 0.00390625
    %v316 = vadd.f32 %v314, 1e-08
    %v317 = vadd.f32 %v315, 1e-08
    %v318 = vrsqrt.pop %v316
    %v319 = vrsqrt.pop %v317
    %v320 = vmul.f32 %v300, %v318
    %v321 = vmul.f32 %v301, %v318
    %v322 = vmul.f32 %v302, %v319
    %v323 = vmul.f32 %v303, %v319
    %324 = vst [vmem:[#allocation7] sm:$0xff] %v320
    %325 = vst [vmem:[#allocation7 + $0x8] sm:$0xff] %v321
    %326 = vst [vmem:[#allocation7 + $0x10] sm:$0xff] %v322
    %327 = vst [vmem:[#allocation7 + $0x18] sm:$0xff] %v323
    // Predicated region
    $region22: #{tpu_custom_call.1} parent=1 // pred_check
      _
    $region23: #{tpu_custom_call.1} parent=1 // pred_check_branch
      %329 = sbr.rel (0) target = $region25
    $region24: #{tpu_custom_call.1} parent=1 // pred_region
      %s331 = ssub.s32 512, 512
      %332 = vsyncadd [#allocation4], %s331
      %s333 = sshll.u32 [#allocation7], 4
      %s334 = int_to_ptr.vmem [resolvable:$true] %s333
      %339 = dma.vmem_to_hbm [thread:$0]  %s334, 512, %s3, [#allocation4], 256, 256, 16
    $region25: #{tpu_custom_call.1} parent=1 // pred_fallthru
      _
    // Predicated region
    $region26: #{tpu_custom_call.1} parent=1 // pred_check
      _
    $region27: #{tpu_custom_call.1} parent=1 // pred_check_branch
      %341 = sbr.rel (0) target = $region29
    $region28: #{tpu_custom_call.1} parent=1 // pred_region
      %342 = dma.done [#allocation4], 512
    $region29: #{tpu_custom_call.1} parent=1 // pred_fallthru
      _
    %343 = vsyncpa [#allocation3], 1
    %344 = vsyncpa [#allocation6], 1
    %345 = vsyncpa [#allocation4], 1

</llo_original>
